<compile_context>
chip_gen: v6e
topology: v6e:2x2x1
jax: 0.10.0
libtpu: 0.0.40
codegen_flags: <defaults>
</compile_context>

<pallas_src>
import functools

import jax
import jax.numpy as jnp
from jax.experimental import pallas as pl
from jax.experimental.pallas import tpu as pltpu

LANES = 128   # vreg lane width -> lane-dense output tile
TM = 8        # f32 sublane count -> batch rows per grid step


def _round_up(x, m):
    return ((x + m - 1) // m) * m


def _fused_linear_relu_kernel(scalar_ref, x_ref, wt_ref, bo_ref, o_ref):
    """out_tile = relu(x_tile @ Wt + (bias + other)) + scalar

    scalar_ref : SMEM (1,)            other_scalar
    x_ref      : VMEM (TM, in_f)      batch tile of inputs
    wt_ref     : VMEM (in_f, n_pad)   pre-transposed, lane-padded weight
    bo_ref     : VMEM (1, n_pad)      bias + other, lane-padded
    o_ref      : VMEM (TM, n_pad)     lane-dense output tile
    """
    x = x_ref[...]
    wt = wt_ref[...]
    in_f = x.shape[1]
    if in_f <= 8:
        # Tiny K: contract on the VPU (static unroll of broadcast mul-adds),
        # avoiding an MXU push/drain of a mostly-empty systolic tile.
        acc = x[:, 0:1] * wt[0:1, :]
        for k in range(1, in_f):
            acc = acc + x[:, k:k + 1] * wt[k:k + 1, :]
    else:
        acc = jnp.dot(x, wt, preferred_element_type=jnp.float32)
    v = jnp.maximum(acc + bo_ref[...], 0.0) + scalar_ref[0]
    o_ref[...] = v.astype(o_ref.dtype)


def prepare_params(weight, bias, other):
    """One-time parameter prep (hoisted out of the forward path).

    Returns:
      w_t_padded  : (in_f, n_pad) f32  -- W.T, zero-padded to 128-lane multiple
      bias_other  : (1, n_pad)    f32  -- (bias + other), padded the same way
    """
    out_f, in_f = weight.shape
    n_pad = _round_up(out_f, LANES)
    w_t_padded = jnp.zeros((in_f, n_pad), jnp.float32).at[:, :out_f].set(
        weight.astype(jnp.float32).T)
    bias_other = jnp.zeros((1, n_pad), jnp.float32).at[:, :out_f].set(
        bias.reshape(1, out_f).astype(jnp.float32) + other.astype(jnp.float32))
    return w_t_padded, bias_other


@functools.partial(jax.jit, static_argnames=("out_f",))
def model_forward(x, w_t_padded, bias_other_padded, other_scalar, *, out_f):
    """Pallas implementation of: relu(Linear(x) + other) + other_scalar."""
    batch, in_f = x.shape
    n_pad = w_t_padded.shape[1]
    b_pad = _round_up(batch, TM)

    x_p = x.astype(jnp.float32)
    if b_pad != batch:
        x_p = jnp.pad(x_p, ((0, b_pad - batch), (0, 0)))
    scalar = jnp.asarray(other_scalar, jnp.float32).reshape(1)

    grid = (b_pad // TM,)
    cost = pl.CostEstimate(
        flops=2 * b_pad * in_f * n_pad + 2 * b_pad * n_pad,
        transcendentals=0,
        bytes_accessed=4 * (b_pad * in_f + in_f * n_pad + n_pad + b_pad * n_pad),
    )

    # NOTE: tiles here are tiny; if this pattern is scaled up, re-derive tile
    # sizes against the 64 MiB VMEM on v7x and set vmem_limit_bytes explicitly.
    out = pl.pallas_call(
        _fused_linear_relu_kernel,
        out_shape=jax.ShapeDtypeStruct((b_pad, n_pad), jnp.float32),
        grid=grid,
        in_specs=[
            pl.BlockSpec(memory_space=pltpu.MemorySpace.SMEM),  # other_scalar
            pl.BlockSpec((TM, in_f), lambda i: (i, 0)),         # x batch tile
            pl.BlockSpec((in_f, n_pad), lambda i: (0, 0)),      # W.T (padded)
            pl.BlockSpec((1, n_pad), lambda i: (0, 0)),         # bias + other
        ],
        out_specs=pl.BlockSpec((TM, n_pad), lambda i: (i, 0)),
        compiler_params=pltpu.CompilerParams(
            dimension_semantics=("parallel",)),
        cost_estimate=cost,
    )(scalar, x_p, w_t_padded, bias_other_padded)

    return out[:batch, :out_f]


if __name__ == "__main__":
    key = jax.random.PRNGKey(0)
    k_x, k_w, k_b, k_o = jax.random.split(key, 4)

    batch, in_f, out_f = 1, 4, 3

    # Deterministic inputs at nn.Linear(4, 3) shapes.
    x1 = jax.random.normal(k_x, (batch, in_f), dtype=jnp.float32)
    weight = jax.random.normal(k_w, (out_f, in_f), dtype=jnp.float32) * 0.5
    bias = jax.random.normal(k_b, (out_f,), dtype=jnp.float32) * 0.1
    other = jax.random.normal(k_o, (1, out_f), dtype=jnp.float32)
    other_scalar = 4.0

    # One-time parameter prep (not part of the per-call forward path).
    w_t_p, bo_p = prepare_params(weight, bias, other)

    out = jax.block_until_ready(
        model_forward(x1, w_t_p, bo_p, other_scalar, out_f=out_f))

    # Pure-JAX reference check.
    ref = jnp.maximum(x1 @ weight.T + bias + other, 0.0) + other_scalar
    assert out.shape == (batch, out_f)
    assert jnp.allclose(out, ref, atol=1e-5, rtol=1e-5), (out, ref)

    # Different scalar value: same compiled kernel, numerics stay correct.
    out2 = jax.block_until_ready(
        model_forward(x1, w_t_p, bo_p, 1.5, out_f=out_f))
    ref2 = jnp.maximum(x1 @ weight.T + bias + other, 0.0) + 1.5
    assert jnp.allclose(out2, ref2, atol=1e-5, rtol=1e-5), (out2, ref2)

    # Batched call exercising the grid (multiple TM=8 tiles, megacore path).
    xb = jax.random.normal(jax.random.PRNGKey(1), (32, in_f), dtype=jnp.float32)
    outb = jax.block_until_ready(
        model_forward(xb, w_t_p, bo_p, other_scalar, out_f=out_f))
    refb = jnp.maximum(xb @ weight.T + bias + other, 0.0) + other_scalar
    assert outb.shape == (32, out_f)
    assert jnp.allclose(outb, refb, atol=1e-5, rtol=1e-5), (outb, refb)

    print("KERNEL_OK")
</pallas_src>

<mosaic_0001>
module attributes {stable_mosaic.version = 11 : i64} {
  func.func @_fused_linear_relu_kernel(%arg0: i32, %arg1: memref<1xf32, #tpu.memory_space<smem>>, %arg2: memref<8x4xf32, #tpu.memory_space<vmem>>, %arg3: memref<4x128xf32, #tpu.memory_space<vmem>>, %arg4: memref<1x128xf32, #tpu.memory_space<vmem>>, %arg5: memref<8x128xf32, #tpu.memory_space<vmem>>) attributes {dimension_semantics = [#tpu.dimension_semantics<parallel>], iteration_bounds = array<i64: 1>, scalar_prefetch = 0 : i64, scratch_operands = 0 : i64, tpu.core_type = #tpu.core_type<tc>, window_params = [{transform_indices = @transform_0, window_bounds = array<i64: 1>}, {transform_indices = @transform_1, window_bounds = array<i64: 8, 4>}, {pipeline_mode = #tpu.pipeline_mode<synchronous>, transform_indices = @transform_2, window_bounds = array<i64: 4, 128>}, {pipeline_mode = #tpu.pipeline_mode<synchronous>, transform_indices = @transform_3, window_bounds = array<i64: 1, 128>}, {transform_indices = @transform_4, window_bounds = array<i64: 8, 128>}]} {
    %c0 = arith.constant 0 : index
    %c0_0 = arith.constant 0 : index
    %0 = vector.load %arg2[%c0, %c0_0] : memref<8x4xf32, #tpu.memory_space<vmem>>, vector<8x4xf32>
    %c0_1 = arith.constant 0 : index
    %c0_2 = arith.constant 0 : index
    %1 = vector.load %arg3[%c0_1, %c0_2] : memref<4x128xf32, #tpu.memory_space<vmem>>, vector<4x128xf32>
    %2 = vector.extract_strided_slice %0 {offsets = [0, 0], sizes = [8, 1], strides = [1, 1]} : vector<8x4xf32> to vector<8x1xf32>
    %3 = vector.extract_strided_slice %1 {offsets = [0, 0], sizes = [1, 128], strides = [1, 1]} : vector<4x128xf32> to vector<1x128xf32>
    %4 = vector.broadcast %2 : vector<8x1xf32> to vector<8x128xf32>
    %5 = vector.broadcast %3 : vector<1x128xf32> to vector<8x128xf32>
    %6 = arith.mulf %4, %5 : vector<8x128xf32>
    %7 = vector.extract_strided_slice %0 {offsets = [0, 1], sizes = [8, 1], strides = [1, 1]} : vector<8x4xf32> to vector<8x1xf32>
    %8 = vector.extract_strided_slice %1 {offsets = [1, 0], sizes = [1, 128], strides = [1, 1]} : vector<4x128xf32> to vector<1x128xf32>
    %9 = vector.broadcast %7 : vector<8x1xf32> to vector<8x128xf32>
    %10 = vector.broadcast %8 : vector<1x128xf32> to vector<8x128xf32>
    %11 = arith.mulf %9, %10 : vector<8x128xf32>
    %12 = arith.addf %6, %11 : vector<8x128xf32>
    %13 = vector.extract_strided_slice %0 {offsets = [0, 2], sizes = [8, 1], strides = [1, 1]} : vector<8x4xf32> to vector<8x1xf32>
    %14 = vector.extract_strided_slice %1 {offsets = [2, 0], sizes = [1, 128], strides = [1, 1]} : vector<4x128xf32> to vector<1x128xf32>
    %15 = vector.broadcast %13 : vector<8x1xf32> to vector<8x128xf32>
    %16 = vector.broadcast %14 : vector<1x128xf32> to vector<8x128xf32>
    %17 = arith.mulf %15, %16 : vector<8x128xf32>
    %18 = arith.addf %12, %17 : vector<8x128xf32>
    %19 = vector.extract_strided_slice %0 {offsets = [0, 3], sizes = [8, 1], strides = [1, 1]} : vector<8x4xf32> to vector<8x1xf32>
    %20 = vector.extract_strided_slice %1 {offsets = [3, 0], sizes = [1, 128], strides = [1, 1]} : vector<4x128xf32> to vector<1x128xf32>
    %21 = vector.broadcast %19 : vector<8x1xf32> to vector<8x128xf32>
    %22 = vector.broadcast %20 : vector<1x128xf32> to vector<8x128xf32>
    %23 = arith.mulf %21, %22 : vector<8x128xf32>
    %24 = arith.addf %18, %23 : vector<8x128xf32>
    %c0_3 = arith.constant 0 : index
    %c0_4 = arith.constant 0 : index
    %25 = vector.load %arg4[%c0_3, %c0_4] : memref<1x128xf32, #tpu.memory_space<vmem>>, vector<1x128xf32>
    %26 = vector.broadcast %25 : vector<1x128xf32> to vector<8x128xf32>
    %27 = arith.addf %24, %26 : vector<8x128xf32>
    %cst = arith.constant 0.000000e+00 : f32
    %28 = vector.broadcast %cst : f32 to vector<8x128xf32>
    %29 = arith.maximumf %27, %28 : vector<8x128xf32>
    %c0_5 = arith.constant 0 : index
    %30 = memref.load %arg1[%c0_5] : memref<1xf32, #tpu.memory_space<smem>>
    %31 = vector.broadcast %30 : f32 to vector<8x128xf32>
    %32 = arith.addf %29, %31 : vector<8x128xf32>
    %c0_6 = arith.constant 0 : index
    %c0_7 = arith.constant 0 : index
    %33 = vector.load %arg5[%c0_6, %c0_7] : memref<8x128xf32, #tpu.memory_space<vmem>>, vector<8x128xf32>
    tpu.vector_store %arg5[%c0_6, %c0_7], %32 {strides = array<i32>} : memref<8x128xf32, #tpu.memory_space<vmem>>, vector<8x128xf32>,
    return
  }
  func.func @transform_0(%arg0: i32) -> i32 {
    %c0_i32 = arith.constant 0 : i32
    %c0_i32_0 = arith.constant 0 : i32
    return %c0_i32 : i32
  }
  func.func @transform_1(%arg0: i32) -> (i32, i32) {
    %c0_i32 = arith.constant 0 : i32
    %c0_i32_0 = arith.constant 0 : i32
    return %arg0, %c0_i32 : i32, i32
  }
  func.func @transform_2(%arg0: i32) -> (i32, i32) {
    %c0_i32 = arith.constant 0 : i32
    %c0_i32_0 = arith.constant 0 : i32
    %c0_i32_1 = arith.constant 0 : i32
    return %c0_i32, %c0_i32_0 : i32, i32
  }
  func.func @transform_3(%arg0: i32) -> (i32, i32) {
    %c0_i32 = arith.constant 0 : i32
    %c0_i32_0 = arith.constant 0 : i32
    %c0_i32_1 = arith.constant 0 : i32
    return %c0_i32, %c0_i32_0 : i32, i32
  }
  func.func @transform_4(%arg0: i32) -> (i32, i32) {
    %c0_i32 = arith.constant 0 : i32
    %c0_i32_0 = arith.constant 0 : i32
    return %arg0, %c0_i32 : i32, i32
  }
}

</mosaic_0001>

<llo_original>
// kernel: model_forward.1
$region0: #{model_forward.1}
  #allocation0 [shape = 'u32[]', space=smem, size = 0x4, offset = 0x4, fixed_abs, tag = 'smem constant byte address 0x4 - core index']
  #allocation1 [shape = 'u32[144,128]{1,0:T(1,128)}', space=vmem, size = 0x12000, scoped, tag = 'internal scratch']
  #allocation2 [shape = 'f32[1]{0:T(128)S(6)}', space=smem, size = 0x200, scoped, tag = 'scoped memory for model_forward.1']
  %s0 = inlined_call_operand.<no memory space> [shape: f32[1], index: 0, kind: input, shape index: {}]
  %s1 = inlined_call_operand.vmem [shape: f32[8,4], index: 1, kind: input, shape index: {}]
  %s2 = inlined_call_operand.vmem [shape: f32[4,128], index: 2, kind: input, shape index: {}]
  %s3 = inlined_call_operand.vmem [shape: f32[1,128], index: 3, kind: input, shape index: {}]
  %s4 = inlined_call_operand.vmem [shape: f32[8,128], index: 4, kind: output, shape index: {}]
  %s5 = sld [smem:[#allocation0]]
  $region26: #{model_forward.1} parent=0
    _
  %s7 = ssub.s32 1, %s5
  %s8 = scalar_select 0, %s7, %s5
  %9 = sst [smem:[#allocation2]] %s0
  // Predicated region
  $region2: #{model_forward.1} parent=0 // pred_check
    _
  $region3: #{model_forward.1} parent=0 // pred_check_branch
    %11 = sbr.rel (0) target = $region5
  $region4: #{model_forward.1} parent=0 // pred_region
    _
  $region5: #{model_forward.1} parent=0 // pred_fallthru
    _
  // Predicated region
  $region6: #{model_forward.1} parent=0 // pred_check
    _
  $region7: #{model_forward.1} parent=0 // pred_check_branch
    %13 = sbr.rel (0) target = $region9
  $region8: #{model_forward.1} parent=0 // pred_region
    _
  $region9: #{model_forward.1} parent=0 // pred_fallthru
    _
  // Predicated region
  $region10: #{model_forward.1} parent=0 // pred_check
    _
  $region11: #{model_forward.1} parent=0 // pred_check_branch
    %15 = sbr.rel (0) target = $region13
  $region12: #{model_forward.1} parent=0 // pred_region
    _
  $region13: #{model_forward.1} parent=0 // pred_fallthru
    _
  // Predicated region
  $region14: #{model_forward.1} parent=0 // pred_check
    _
  $region15: #{model_forward.1} parent=0 // pred_check_branch
    %17 = sbr.rel (0) target = $region17
  $region16: #{model_forward.1} parent=0 // pred_region
    _
  $region17: #{model_forward.1} parent=0 // pred_fallthru
    _
  %v18 = vld [vmem:[%s1] sm:$0xff]
  %v19 = vld [vmem:[%s2] sm:$0xf]
  %21 = vset.pattern.permute.xlu0 0
  %22 = vperm.xlu0 %21, %v18
  %v23 = vpop.permute.xlu0 %22
  %v25 = vlaneseq
  %v26 = vshrl.u32 %v25, 7
  %v27 = vsub.s32 0, %v26
  %v28 = vrot.slane %v19, %v27
  %v29 = vmul.f32 %v23, %v28
  %30 = vset.pattern.permute.xlu0 1
  %31 = vperm.xlu0 %30, %v18
  %v32 = vpop.permute.xlu0 %31
  %v34 = vlaneseq
  %v35 = vshrl.u32 %v34, 7
  %v36 = vsub.s32 1, %v35
  %v37 = vrot.slane %v19, %v36
  %v38 = vmul.f32 %v32, %v37
  %v39 = vadd.f32 %v29, %v38
  %40 = vset.pattern.permute.xlu0 2
  %41 = vperm.xlu0 %40, %v18
  %v42 = vpop.permute.xlu0 %41
  %v44 = vlaneseq
  %v45 = vshrl.u32 %v44, 7
  %v46 = vsub.s32 2, %v45
  %v47 = vrot.slane %v19, %v46
  %v48 = vmul.f32 %v42, %v47
  %v49 = vadd.f32 %v39, %v48
  %50 = vset.pattern.permute.xlu0 3
  %51 = vperm.xlu0 %50, %v18
  %v52 = vpop.permute.xlu0 %51
  %v54 = vlaneseq
  %v55 = vshrl.u32 %v54, 7
  %v56 = vsub.s32 3, %v55
  %v57 = vrot.slane %v19, %v56
  %v58 = vmul.f32 %v52, %v57
  %v59 = vadd.f32 %v49, %v58
  %v60 = vld [vmem:[%s3] sm:$0x1]
  %v62 = vlaneseq
  %v63 = vshrl.u32 %v62, 7
  %v64 = vsub.s32 0, %v63
  %v65 = vrot.slane %v60, %v64
  %v67 = vadd.f32 %v59, %v65
  %v68 = vmax.f32 %v67, 0.0
  %s69 = sld [smem:[#allocation2]]
  %v70 = vstv %s69
  %v71 = vadd.f32 %v68, %v70
  %72 = vst [vmem:[%s4] sm:$0xff] %v71
  // Predicated region
  $region18: #{model_forward.1} parent=0 // pred_check
    _
  $region19: #{model_forward.1} parent=0 // pred_check_branch
    %74 = sbr.rel (0) target = $region21
  $region20: #{model_forward.1} parent=0 // pred_region
    _
  $region21: #{model_forward.1} parent=0 // pred_fallthru
    _
  // Predicated region
  $region22: #{model_forward.1} parent=0 // pred_check
    _
  $region23: #{model_forward.1} parent=0 // pred_check_branch
    %76 = sbr.rel (0) target = $region25
  $region24: #{model_forward.1} parent=0 // pred_region
    _
  $region25: #{model_forward.1} parent=0 // pred_fallthru
    _

</llo_original>
